<compile_context>
chip_gen: v7x
topology: tpu7x:2x2x1
jax: 0.10.0
libtpu: 0.0.40
codegen_flags: <defaults>
</compile_context>

<pallas_src>
import functools

import jax
import jax.numpy as jnp
from jax.experimental import pallas as pl
from jax.experimental.pallas import tpu as pltpu


# ----------------------------------------------------------------------------
# Optional single-buffering for VMEM-resident operands (probed once)
# ----------------------------------------------------------------------------
_SINGLE_BUFFER_OK = None


def _copy_kernel(x_ref, o_ref):
    o_ref[...] = x_ref[...]


def _single_buffer_supported():
    """Probe whether pipeline_mode=pl.Buffered(1) compiles on this backend."""
    global _SINGLE_BUFFER_OK
    if _SINGLE_BUFFER_OK is None:
        try:
            y = pl.pallas_call(
                _copy_kernel,
                out_shape=jax.ShapeDtypeStruct((8, 128), jnp.float32),
                grid=(1,),
                in_specs=[pl.BlockSpec((8, 128), lambda i: (0, 0),
                                       pipeline_mode=pl.Buffered(1))],
                out_specs=pl.BlockSpec((8, 128), lambda i: (0, 0)),
            )(jnp.zeros((8, 128), jnp.float32))
            jax.block_until_ready(y)
            _SINGLE_BUFFER_OK = True
        except Exception:
            _SINGLE_BUFFER_OK = False
    return _SINGLE_BUFFER_OK


def _resident_spec(shape):
    """BlockSpec for a grid-invariant (VMEM-resident) operand.

    Single-buffered when supported (saves ~3.5 MB for the conv2 banded weights,
    relevant on v7x's 64 MiB VMEM); falls back to the default double-buffered
    spec otherwise.
    """
    index_map = lambda i: (0,) * len(shape)
    if _single_buffer_supported():
        return pl.BlockSpec(shape, index_map, pipeline_mode=pl.Buffered(1))
    return pl.BlockSpec(shape, index_map)


# ----------------------------------------------------------------------------
# Trace-time construction of banded conv(+pool-parity) weight matrices (tiny)
# ----------------------------------------------------------------------------
def banded_pool_weights(wt, W, *, k_pad=None, n_pad=None):
    """wt: [C_out, C_in, 5, 5] PyTorch Conv2d weight; W: conv output width.

    Returns G of shape [3, Kp, 4*Np] (Kp >= 2*(W+4)*C_in rows, zero-padded;
    Np >= (W//2)*C_out lanes per parity, zero-padded) such that, with the
    padded input stored as pair-rows X2[p, q*(W+4)*C_in + wp*C_in + ci] =
    x_pad[2p+q, wp, ci], the pre-pool conv output at row 2r+s, col 2w'+t is
        sum_{dp=0..2}  X2[r+dp, :] @ G[dp][:, (2s+t)*Np + w'*C_out + co].
    """
    C_out, C_in, KH, KW = wt.shape
    Wp, Wh = W + 4, W // 2
    Wpc = Wp * C_in
    K2 = 2 * Wpc
    Kp = K2 if k_pad is None else k_pad
    Nc = Wh * C_out
    Np = Nc if n_pad is None else n_pad
    out = jnp.zeros((3, Kp, 4 * Np), jnp.float32)
    for dp in range(3):
        for s in (0, 1):              # conv-row parity inside the 2x2 window
            for t in (0, 1):          # conv-col parity inside the 2x2 window
                j = 2 * s + t
                M = jnp.zeros((K2, Nc), jnp.float32)
                for q in (0, 1):      # which padded row inside pair-row dp
                    dh = 2 * dp + q - s
                    if 0 <= dh < KH:
                        half = jnp.zeros((Wpc, Nc), jnp.float32)
                        for dw in range(KW):
                            shift = jnp.zeros((Wp, Wh), jnp.float32).at[
                                2 * jnp.arange(Wh) + t + dw, jnp.arange(Wh)
                            ].set(1.0)
                            half = half + jnp.kron(shift, wt[:, :, dh, dw].T)
                        M = M.at[q * Wpc:(q + 1) * Wpc, :].set(half)
                out = out.at[dp, :K2, j * Np:j * Np + Nc].set(M)
    return out


def _conv_bias_lanes(b, pooled_w, n_par):
    """Per-parity bias lanes: lane w'*C_out + co -> b[co]; padding lanes = 0."""
    nc = pooled_w * b.shape[0]
    return jnp.zeros((n_par,), jnp.float32).at[:nc].set(jnp.tile(b, pooled_w))


def _fold_linear_params(w3, b3):
    """Scatter/permute w3 rows so the linear layer consumes conv2's padded
    NHWC-lane output [B, 8*256] directly (NCHW flatten folded into the weight);
    N is padded 10 -> 128 for lane-dense stores."""
    h = jnp.arange(7)
    w = jnp.arange(7)
    c = jnp.arange(32)
    dest = (h[:, None, None] * 256 + w[None, :, None] * 32
            + c[None, None, :]).reshape(-1)                 # rows in padded layout
    src = (c[None, None, :] * 49 + h[:, None, None] * 7
           + w[None, :, None]).reshape(-1)                  # NCHW flatten index
    wf = jnp.zeros((8 * 256, 128), jnp.float32).at[dest, :10].set(w3[:, src].T)
    bf = jnp.zeros((128,), jnp.float32).at[:10].set(b3)
    return wf, bf


def prepare_params(params):
    """One-time preparation of kernel-ready weights (run once, outside forward)."""
    w3f, b3f = _fold_linear_params(params["w3"], params["b3"])
    return {
        "w1b": banded_pool_weights(params["w1"], W=28, k_pad=128,
                                   n_pad=256).astype(jnp.bfloat16),
        "b1": _conv_bias_lanes(params["b1"], pooled_w=14, n_par=256),
        "w2b": banded_pool_weights(params["w2"], W=14,
                                   n_pad=256).astype(jnp.bfloat16),
        "b2": _conv_bias_lanes(params["b2"], pooled_w=7, n_par=256),
        "w3f": w3f.astype(jnp.bfloat16),
        "b3f": b3f,
    }


# ----------------------------------------------------------------------------
# Pallas kernels
# ----------------------------------------------------------------------------
def _conv_relu_pool_kernel(x0_ref, x1_ref, x2_ref, w_ref, b_ref, o_ref, *,
                           n_par, rows_per_img, rows_valid):
    """Fused 5x5 'same' conv + bias + ReLU + 2x2/2 max-pool, batch folded into M.

    x{0,1,2}_ref: [bm, K]        dp-shifted pair-row inputs (bm = block of B*Rp rows)
    w_ref:        [3, K, 4*Np]   merged banded weights (VMEM-resident)
    b_ref:        [1, Np]
    o_ref:        [bm, Np]       pooled output (lane = w'*C_out + co, zero-padded)
    """
    # Three accumulating MXU matmuls (one per pair-row offset), f32 accumulator.
    acc = jnp.dot(x0_ref[...], w_ref[0], preferred_element_type=jnp.float32)
    acc += jnp.dot(x1_ref[...], w_ref[1], preferred_element_type=jnp.float32)
    acc += jnp.dot(x2_ref[...], w_ref[2], preferred_element_type=jnp.float32)
    # 2x2 max-pool = max over the four (row,col)-parity column groups
    # (vreg-aligned 256-lane slices of the 1024-lane accumulator).
    pooled = jnp.maximum(
        jnp.maximum(acc[:, 0 * n_par:1 * n_par], acc[:, 1 * n_par:2 * n_par]),
        jnp.maximum(acc[:, 2 * n_par:3 * n_par], acc[:, 3 * n_par:4 * n_par]))
    pooled = jnp.maximum(pooled + b_ref[...], 0.0)     # bias + ReLU (commute with max)
    # Zero the per-image row padding (rows_valid..rows_per_img-1) so the output
    # doubles as the next layer's bottom zero padding.
    bm = o_ref.shape[0]
    row = (pl.program_id(0) * bm
           + jax.lax.broadcasted_iota(jnp.int32, (bm, n_par), 0)) & (rows_per_img - 1)
    pooled = jnp.where(row < rows_valid, pooled, 0.0)
    o_ref[...] = pooled.astype(o_ref.dtype)


def _linear_kernel(a_ref, w_ref, b_ref, o_ref):
    o_ref[...] = (jnp.dot(a_ref[...], w_ref[...],
                          preferred_element_type=jnp.float32)
                  + b_ref[...]).astype(o_ref.dtype)


# ----------------------------------------------------------------------------
# Wrappers
# ----------------------------------------------------------------------------
def _pick_bm(M, cap):
    """Largest multiple-of-8 divisor of M that is <= cap, preferring >= 2 grid
    steps so ("parallel",) can shard across both TensorCores on v7x."""
    best = None
    bm = min(cap, M)
    while bm >= 8:
        if M % bm == 0:
            if M // bm >= 2:
                return bm
            if best is None:
                best = bm
        bm -= 8
    return best if best is not None else M


def conv_relu_pool(x_pairs, w_banded, bias_vec, *, rows_per_img, rows_valid,
                   out_dtype, bm_cap):
    """x_pairs: [B, rows_per_img + 2, K] zero-padded pair-row input.
    Returns [B*rows_per_img, Np] pooled output."""
    B, Pp, Kp = x_pairs.shape
    Rp = rows_per_img
    assert Pp == Rp + 2
    Np = w_banded.shape[-1] // 4
    M = B * Rp

    xb = x_pairs.astype(jnp.bfloat16)
    # Three dp-shifted views flattened to 2-D so the batch folds into matmul M.
    x0 = xb[:, 0:Rp, :].reshape(M, Kp)
    x1 = xb[:, 1:Rp + 1, :].reshape(M, Kp)
    x2 = xb[:, 2:Rp + 2, :].reshape(M, Kp)

    bm = _pick_bm(M, bm_cap)
    kernel = functools.partial(_conv_relu_pool_kernel, n_par=Np,
                               rows_per_img=Rp, rows_valid=rows_valid)
    return pl.pallas_call(
        kernel,
        out_shape=jax.ShapeDtypeStruct((M, Np), out_dtype),
        grid=(M // bm,),
        in_specs=[
            pl.BlockSpec((bm, Kp), lambda i: (i, 0)),
            pl.BlockSpec((bm, Kp), lambda i: (i, 0)),
            pl.BlockSpec((bm, Kp), lambda i: (i, 0)),
            _resident_spec(tuple(w_banded.shape)),     # VMEM-resident weights
            _resident_spec((1, Np)),                   # VMEM-resident bias
        ],
        out_specs=pl.BlockSpec((bm, Np), lambda i: (i, 0)),
        compiler_params=pltpu.CompilerParams(
            dimension_semantics=("parallel",),
            vmem_limit_bytes=32 * 1024 * 1024),
    )(x0, x1, x2, w_banded.astype(jnp.bfloat16),
      bias_vec.reshape(1, Np).astype(jnp.float32))


def linear(a, w, bias_vec):
    """a: [B, K], w: [K, N] (N multiple of 128), bias: [N] -> [B, N] f32."""
    B, K = a.shape
    N = w.shape[1]
    bm = B
    for cand in (256, 128, 64, 32, 16, 8):
        if B % cand == 0:
            bm = cand
            break
    return pl.pallas_call(
        _linear_kernel,
        out_shape=jax.ShapeDtypeStruct((B, N), jnp.float32),
        grid=(B // bm,),
        in_specs=[
            pl.BlockSpec((bm, K), lambda i: (i, 0)),
            _resident_spec((K, N)),
            _resident_spec((1, N)),
        ],
        out_specs=pl.BlockSpec((bm, N), lambda i: (i, 0)),
        compiler_params=pltpu.CompilerParams(dimension_semantics=("parallel",)),
    )(a.astype(jnp.bfloat16), w.astype(jnp.bfloat16),
      bias_vec.reshape(1, N).astype(jnp.float32))


# ----------------------------------------------------------------------------
# Forward pass (matches PyTorch CNN.forward)
# ----------------------------------------------------------------------------
def cnn_forward(x_nchw, prep):
    B = x_nchw.shape[0]

    # conv1 + ReLU + pool: [B,1,28,28] -> [B*16, 256]
    #   (== [B,16,16,16] NHWC with rows/cols 14,15 zero)
    x = x_nchw.reshape(B, 28, 28, 1)                    # C=1: NCHW == NHWC
    xp = jnp.pad(x, ((0, 0), (2, 2), (2, 2), (0, 0)))   # [B,32,32,1]
    xp = xp.reshape(B, 16, 64)                          # pair-row layout
    xp = jnp.pad(xp, ((0, 0), (0, 2), (0, 64)))         # rows 16->18, K 64->128
    y1 = conv_relu_pool(xp, prep["w1b"], prep["b1"], rows_per_img=16,
                        rows_valid=14, out_dtype=jnp.bfloat16, bm_cap=512)

    # conv2 + ReLU + pool: -> [B*8, 256] (== [B,8,8,32] NHWC with row/col 7 zero)
    # conv1 already produced the bottom/right zero padding; add only top/left.
    y1p = jnp.pad(y1.reshape(B, 16, 16, 16),
                  ((0, 0), (2, 0), (2, 0), (0, 0)))     # [B,18,18,16]
    y1p = y1p.reshape(B, 9, 576)                        # pair-row layout
    y1p = jnp.pad(y1p, ((0, 0), (0, 1), (0, 0)))        # rows 9->10
    y2 = conv_relu_pool(y1p, prep["w2b"], prep["b2"], rows_per_img=8,
                        rows_valid=7, out_dtype=jnp.float32, bm_cap=256)

    # Features in PyTorch NCHW-flatten order (the module returns this tensor);
    # the transpose is off the logits critical path.
    feat = (y2.reshape(B, 8, 8, 32)[:, :7, :7, :]
            .transpose(0, 3, 1, 2).reshape(B, 32 * 7 * 7))

    # out: Linear(1568, 10) -- NCHW permutation folded into the padded weight,
    # so the padded NHWC activation is consumed directly; N padded 10 -> 128.
    logits = linear(y2.reshape(B, 8 * 256), prep["w3f"], prep["b3f"])[:, :10]
    return logits, feat


# ----------------------------------------------------------------------------
# Pure-JAX reference (for an in-script sanity check) and parameter init
# ----------------------------------------------------------------------------
def cnn_reference(x_nchw, params):
    y = jax.lax.conv_general_dilated(x_nchw, params["w1"], (1, 1),
                                     ((2, 2), (2, 2)),
                                     dimension_numbers=("NCHW", "OIHW", "NCHW"))
    y = jax.nn.relu(y + params["b1"][None, :, None, None])
    y = jax.lax.reduce_window(y, -jnp.inf, jax.lax.max,
                              (1, 1, 2, 2), (1, 1, 2, 2), "VALID")
    y = jax.lax.conv_general_dilated(y, params["w2"], (1, 1),
                                     ((2, 2), (2, 2)),
                                     dimension_numbers=("NCHW", "OIHW", "NCHW"))
    y = jax.nn.relu(y + params["b2"][None, :, None, None])
    y = jax.lax.reduce_window(y, -jnp.inf, jax.lax.max,
                              (1, 1, 2, 2), (1, 1, 2, 2), "VALID")
    feat = y.reshape(y.shape[0], -1)
    logits = feat @ params["w3"].T + params["b3"]
    return logits, feat


def init_params(key):
    ks = jax.random.split(key, 6)

    def u(k, shape, fan_in):
        bound = 1.0 / jnp.sqrt(fan_in)
        return jax.random.uniform(k, shape, jnp.float32, -bound, bound)

    return {
        "w1": u(ks[0], (16, 1, 5, 5), 1 * 5 * 5),
        "b1": u(ks[1], (16,), 1 * 5 * 5),
        "w2": u(ks[2], (32, 16, 5, 5), 16 * 5 * 5),
        "b2": u(ks[3], (32,), 16 * 5 * 5),
        "w3": u(ks[4], (10, 32 * 7 * 7), 32 * 7 * 7),
        "b3": u(ks[5], (10,), 32 * 7 * 7),
    }


if __name__ == "__main__":
    key = jax.random.PRNGKey(0)
    k_params, k_x = jax.random.split(key)
    params = init_params(k_params)

    # MNIST-sized input: the Linear(32*7*7, 10) layer forces 28x28 spatial.
    x = jax.random.normal(k_x, (2, 1, 28, 28), dtype=jnp.float32)

    _single_buffer_supported()                 # probe once, outside jit
    prep = jax.jit(prepare_params)(params)     # one-time weight preparation

    logits, feat = jax.jit(cnn_forward)(x, prep)
    jax.block_until_ready((logits, feat))
    assert logits.shape == (2, 10) and feat.shape == (2, 32 * 7 * 7)

    # Sanity check against a pure-JAX f32 reference (loose tol: bf16 matmul inputs).
    ref_logits, ref_feat = jax.jit(cnn_reference)(x, params)
    jax.block_until_ready((ref_logits, ref_feat))
    assert float(jnp.max(jnp.abs(feat - ref_feat))) < 0.20, "feature mismatch"
    assert float(jnp.max(jnp.abs(logits - ref_logits))) < 0.15, "logits mismatch"

    print("KERNEL_OK")
</pallas_src>

<mosaic_0001>
module attributes {stable_mosaic.version = 11 : i64} {
  func.func @_copy_kernel(%arg0: i32, %arg1: memref<8x128xf32, #tpu.memory_space<vmem>>, %arg2: memref<8x128xf32, #tpu.memory_space<vmem>>) attributes {dimension_semantics = [#tpu.dimension_semantics<arbitrary>], iteration_bounds = array<i64: 1>, scalar_prefetch = 0 : i64, scratch_operands = 0 : i64, tpu.core_type = #tpu.core_type<tc>, window_params = [{pipeline_mode = #tpu.pipeline_mode<synchronous>, transform_indices = @transform_0, window_bounds = array<i64: 8, 128>}, {pipeline_mode = #tpu.pipeline_mode<synchronous>, transform_indices = @transform_1, window_bounds = array<i64: 8, 128>}]} {
    %c0 = arith.constant 0 : index
    %c0_0 = arith.constant 0 : index
    %0 = vector.load %arg1[%c0, %c0_0] : memref<8x128xf32, #tpu.memory_space<vmem>>, vector<8x128xf32>
    %c0_1 = arith.constant 0 : index
    %c0_2 = arith.constant 0 : index
    %1 = vector.load %arg2[%c0_1, %c0_2] : memref<8x128xf32, #tpu.memory_space<vmem>>, vector<8x128xf32>
    tpu.vector_store %arg2[%c0_1, %c0_2], %0 {strides = array<i32>} : memref<8x128xf32, #tpu.memory_space<vmem>>, vector<8x128xf32>,
    return
  }
  func.func @transform_0(%arg0: i32) -> (i32, i32) {
    %c0_i32 = arith.constant 0 : i32
    %c0_i32_0 = arith.constant 0 : i32
    %c0_i32_1 = arith.constant 0 : i32
    return %c0_i32, %c0_i32_0 : i32, i32
  }
  func.func @transform_1(%arg0: i32) -> (i32, i32) {
    %c0_i32 = arith.constant 0 : i32
    %c0_i32_0 = arith.constant 0 : i32
    %c0_i32_1 = arith.constant 0 : i32
    return %c0_i32, %c0_i32_0 : i32, i32
  }
}

</mosaic_0001>

<llo_original>
// kernel: tpu_custom_call.1
$region0: #{tpu_custom_call.1}
  #allocation0 [shape = 'u32[]', space=smem, size = 0x4, offset = 0x4, fixed_abs, tag = 'smem constant byte address 0x4 - core index']
  #allocation1 [shape = 'u32[144,128]{1,0:T(1,128)}', space=vmem, size = 0x12000, scoped, tag = 'internal scratch']
  %s0 = inlined_call_operand.hbm [shape: f32[8,128], index: 0, kind: input, shape index: {}]
  %s1 = inlined_call_operand.hbm [shape: f32[8,128], index: 1, kind: output, shape index: {}]
  %s2 = sld [smem:[#allocation0]]
  $region18: #{tpu_custom_call.1} parent=0
    _
  %s4 = ssub.s32 1, %s2
  %s5 = scalar_select 0, %s4, %s2
  $region1: #{tpu_custom_call.1} parent=0
    #allocation2 [shape = 'u8[4096]{0}', space=vmem, size = 0x1000, scoped, tag = 'input window, operand 0, single buffered']
    #allocation3 [shape = 's32[1]{0}', space=sflag, size = 0x4, scoped, tag = 'scoped memory for tpu_custom_call.1']
    #allocation4 [shape = 's32[1]{0}', space=sflag, size = 0x4, scoped, tag = 'scoped memory for tpu_custom_call.1']
    #allocation5 [shape = 'u8[4096]{0}', space=vmem, size = 0x1000, scoped, tag = 'output window, operand 0, single buffered']
    %6 = vsyncpa [#allocation3], 0
    %7 = vsyncpa [#allocation4], 0
    // Predicated region
    $region2: #{tpu_custom_call.1} parent=1 // pred_check
      _
    $region3: #{tpu_custom_call.1} parent=1 // pred_check_branch
      %9 = sbr.rel (0) target = $region5
    $region4: #{tpu_custom_call.1} parent=1 // pred_region
      %s11 = ssub.s32 128, 128
      %12 = vsyncadd [#allocation3], %s11
      %s14 = sshll.u32 [#allocation2], 4
      %s15 = int_to_ptr.vmem [resolvable:$true] %s14
      %17 = dma.hbm_to_vmem [thread:$0]  %s0, 128, %s15, [#allocation3]
    $region5: #{tpu_custom_call.1} parent=1 // pred_fallthru
      _
    // Predicated region
    $region6: #{tpu_custom_call.1} parent=1 // pred_check
      _
    $region7: #{tpu_custom_call.1} parent=1 // pred_check_branch
      %19 = sbr.rel (0) target = $region9
    $region8: #{tpu_custom_call.1} parent=1 // pred_region
      %20 = dma.done [#allocation3], 128
    $region9: #{tpu_custom_call.1} parent=1 // pred_fallthru
      _
    %v21 = vld [vmem:[#allocation2] sm:$0xff]
    %22 = vst [vmem:[#allocation5] sm:$0xff] %v21
    // Predicated region
    $region10: #{tpu_custom_call.1} parent=1 // pred_check
      _
    $region11: #{tpu_custom_call.1} parent=1 // pred_check_branch
      %24 = sbr.rel (0) target = $region13
    $region12: #{tpu_custom_call.1} parent=1 // pred_region
      %s26 = ssub.s32 128, 128
      %27 = vsyncadd [#allocation4], %s26
      %s29 = sshll.u32 [#allocation5], 4
      %s30 = int_to_ptr.vmem [resolvable:$true] %s29
      %32 = dma.vmem_to_hbm [thread:$0]  %s30, 128, %s1, [#allocation4]
    $region13: #{tpu_custom_call.1} parent=1 // pred_fallthru
      _
    // Predicated region
    $region14: #{tpu_custom_call.1} parent=1 // pred_check
      _
    $region15: #{tpu_custom_call.1} parent=1 // pred_check_branch
      %34 = sbr.rel (0) target = $region17
    $region16: #{tpu_custom_call.1} parent=1 // pred_region
      %35 = dma.done [#allocation4], 128
    $region17: #{tpu_custom_call.1} parent=1 // pred_fallthru
      _
    %36 = vsyncpa [#allocation3], 1
    %37 = vsyncpa [#allocation4], 1

</llo_original>
